<compile_context>
chip_gen: v6e
topology: v6e:2x2x1
jax: 0.10.0
libtpu: 0.0.40
codegen_flags: <defaults>
</compile_context>

<pallas_src>
import functools

import jax
import jax.numpy as jnp
from jax.experimental import pallas as pl
from jax.experimental.pallas import tpu as pltpu

EPS = 1e-5
LANE = 128


def _round_up(x, m):
    return ((x + m - 1) // m) * m


def _vmem_limit_bytes():
    """~75% of physical per-TensorCore VMEM (96 MiB v5e/v6e, 48 MiB v7x).

    Falls back to a v7x-safe 48 MiB if the hardware query is unavailable.
    """
    cap = None
    try:
        cap = getattr(pltpu.get_tpu_info(), "vmem_capacity_bytes", None)
    except Exception:
        cap = None
    if not cap:
        cap = 64 * 1024 * 1024
    return int(cap) * 3 // 4


def layernorm_kernel(x_ref, scale_ref, shift_ref, o_ref, *, valid_dim):
    # x_ref: (row_tile, emb_dim) tile in VMEM; scale/shift: (1, emb_dim) f32,
    # resident across the grid (constant index_map).
    x = x_ref[...].astype(jnp.float32)
    inv_d = 1.0 / float(valid_dim)  # static Python constant

    # Two-pass stats over the resident tile: numerically matches PyTorch's
    # std(unbiased=False) (no E[x^2]-mean^2 cancellation) and costs nothing
    # at the HBM roofline.
    mean = jnp.sum(x, axis=-1, keepdims=True) * inv_d
    xc = x - mean
    var = jnp.sum(xc * xc, axis=-1, keepdims=True) * inv_d

    # Exact reciprocal: only a (row_tile, 1) column, so exactness is free and
    # keeps parity with PyTorch's division.
    inv_std = 1.0 / (jnp.sqrt(var) + EPS)

    o_ref[...] = (scale_ref[...] * (xc * inv_std) + shift_ref[...]).astype(o_ref.dtype)


def layer_norm(x, scale, shift, *, row_tile=None):
    """LayerNorm over the last axis of x.

    x:     (..., emb_dim)
    scale: (emb_dim,)
    shift: (emb_dim,)
    """
    orig_shape = x.shape
    emb_dim = orig_shape[-1]
    rows = 1
    for d in orig_shape[:-1]:
        rows *= d
    x2d = x.reshape(rows, emb_dim)

    # Params: cast to f32 once here (not per grid step); kept as resident
    # (1, emb_dim) VMEM blocks.
    scale2d = scale.reshape(1, emb_dim).astype(jnp.float32)
    shift2d = shift.reshape(1, emb_dim).astype(jnp.float32)

    vmem_limit = _vmem_limit_bytes()

    # --- Row tiling --------------------------------------------------------
    # Budget each block by its f32 compute footprint against the *physical*
    # (lane-padded) width, ~1/8 of the VMEM limit per block: covers the
    # double-buffered in/out blocks plus the f32 temporaries with headroom.
    #   v5e/v6e (96 MiB limit) -> ~12 MiB f32 blocks; v7x (48 MiB) -> ~6 MiB.
    itemsize = jnp.dtype(x.dtype).itemsize
    sublane = max(8, 32 // itemsize)  # 8 for f32, 16 for bf16, 32 for int8
    emb_phys = _round_up(emb_dim, LANE)  # physical lane footprint in VMEM
    if row_tile is None:
        f32_block_bytes = max(vmem_limit // 8, 1 << 20)
        row_tile = max(sublane, f32_block_bytes // max(1, emb_phys * 4))
    # Align to sublane and never exceed the (sublane-rounded) row count.
    row_tile = max(sublane, (row_tile // sublane) * sublane)
    row_tile = min(row_tile, _round_up(rows, sublane))

    # Ragged rows are handled by the pipeline's partial final block: no
    # HBM-side jnp.pad, no output slice copy.  Rows are independent, so
    # garbage rows in the final input block only produce garbage output rows
    # that are never written back.
    grid = (pl.cdiv(rows, row_tile),)

    kernel = functools.partial(layernorm_kernel, valid_dim=emb_dim)

    out2d = pl.pallas_call(
        kernel,
        out_shape=jax.ShapeDtypeStruct((rows, emb_dim), x.dtype),
        grid_spec=pltpu.PrefetchScalarGridSpec(
            num_scalar_prefetch=0,
            grid=grid,
            in_specs=[
                # Last block dim equals the full array dim, so no HBM-side
                # lane padding is needed even when emb_dim % 128 != 0.
                pl.BlockSpec((row_tile, emb_dim), lambda i: (i, 0)),
                pl.BlockSpec((1, emb_dim), lambda i: (0, 0)),  # resident scale
                pl.BlockSpec((1, emb_dim), lambda i: (0, 0)),  # resident shift
            ],
            out_specs=pl.BlockSpec((row_tile, emb_dim), lambda i: (i, 0)),
        ),
        compiler_params=pltpu.CompilerParams(
            dimension_semantics=("parallel",),
            vmem_limit_bytes=vmem_limit,
        ),
    )(x2d, scale2d, shift2d)

    return out2d.reshape(orig_shape)


if __name__ == "__main__":
    # Shapes implied by the module: x is (..., emb_dim); use (batch=2, seq=8, emb=32).
    batch, seq, emb_dim = 2, 8, 32
    key = jax.random.PRNGKey(0)
    x = jax.random.normal(key, (batch, seq, emb_dim), dtype=jnp.float32)

    # Deterministic parameter init, matching nn.Parameter(torch.ones/zeros(emb_dim)).
    scale = jnp.ones((emb_dim,), dtype=jnp.float32)
    shift = jnp.zeros((emb_dim,), dtype=jnp.float32)

    out = layer_norm(x, scale, shift)
    out = jax.block_until_ready(out)

    # Pure-JAX reference check (same math as the PyTorch forward).
    mean = jnp.mean(x, axis=-1, keepdims=True)
    std = jnp.sqrt(jnp.mean((x - mean) ** 2, axis=-1, keepdims=True))
    ref = scale * (x - mean) / (std + EPS) + shift
    assert jnp.allclose(out, ref, atol=1e-5, rtol=1e-5), "mismatch vs reference"

    print("KERNEL_OK")
</pallas_src>

<mosaic_0001>
module attributes {stable_mosaic.version = 11 : i64} {
  func.func @layernorm_kernel(%arg0: i32, %arg1: memref<16x32xf32, #tpu.memory_space<vmem>>, %arg2: memref<1x32xf32, #tpu.memory_space<vmem>>, %arg3: memref<1x32xf32, #tpu.memory_space<vmem>>, %arg4: memref<16x32xf32, #tpu.memory_space<vmem>>) attributes {dimension_semantics = [#tpu.dimension_semantics<parallel>], iteration_bounds = array<i64: 1>, scalar_prefetch = 0 : i64, scratch_operands = 0 : i64, tpu.core_type = #tpu.core_type<tc>, window_params = [{transform_indices = @transform_0, window_bounds = array<i64: 16, 32>}, {pipeline_mode = #tpu.pipeline_mode<synchronous>, transform_indices = @transform_1, window_bounds = array<i64: 1, 32>}, {pipeline_mode = #tpu.pipeline_mode<synchronous>, transform_indices = @transform_2, window_bounds = array<i64: 1, 32>}, {transform_indices = @transform_3, window_bounds = array<i64: 16, 32>}]} {
    %c0 = arith.constant 0 : index
    %c0_0 = arith.constant 0 : index
    %0 = vector.load %arg1[%c0, %c0_0] : memref<16x32xf32, #tpu.memory_space<vmem>>, vector<16x32xf32>
    %cst = arith.constant dense<0.000000e+00> : vector<16xf32>
    %1 = vector.multi_reduction <add>, %0, %cst [1] : vector<16x32xf32> to vector<16xf32>
    %2 = vector.shape_cast %1 : vector<16xf32> to vector<16x1xf32>
    %cst_1 = arith.constant 3.125000e-02 : f32
    %3 = vector.broadcast %cst_1 : f32 to vector<16x1xf32>
    %4 = arith.mulf %2, %3 : vector<16x1xf32>
    %5 = vector.broadcast %4 : vector<16x1xf32> to vector<16x32xf32>
    %6 = arith.subf %0, %5 : vector<16x32xf32>
    %7 = arith.mulf %6, %6 : vector<16x32xf32>
    %cst_2 = arith.constant dense<0.000000e+00> : vector<16xf32>
    %8 = vector.multi_reduction <add>, %7, %cst_2 [1] : vector<16x32xf32> to vector<16xf32>
    %9 = vector.shape_cast %8 : vector<16xf32> to vector<16x1xf32>
    %cst_3 = arith.constant 3.125000e-02 : f32
    %10 = vector.broadcast %cst_3 : f32 to vector<16x1xf32>
    %11 = arith.mulf %9, %10 : vector<16x1xf32>
    %12 = math.sqrt %11 : vector<16x1xf32>
    %cst_4 = arith.constant 9.99999974E-6 : f32
    %13 = vector.broadcast %cst_4 : f32 to vector<16x1xf32>
    %14 = arith.addf %12, %13 : vector<16x1xf32>
    %cst_5 = arith.constant 1.000000e+00 : f32
    %15 = vector.broadcast %cst_5 : f32 to vector<16x1xf32>
    %16 = arith.divf %15, %14 : vector<16x1xf32>
    %c0_6 = arith.constant 0 : index
    %c0_7 = arith.constant 0 : index
    %17 = vector.load %arg2[%c0_6, %c0_7] : memref<1x32xf32, #tpu.memory_space<vmem>>, vector<1x32xf32>
    %18 = vector.broadcast %16 : vector<16x1xf32> to vector<16x32xf32>
    %19 = arith.mulf %6, %18 : vector<16x32xf32>
    %20 = vector.broadcast %17 : vector<1x32xf32> to vector<16x32xf32>
    %21 = arith.mulf %20, %19 : vector<16x32xf32>
    %c0_8 = arith.constant 0 : index
    %c0_9 = arith.constant 0 : index
    %22 = vector.load %arg3[%c0_8, %c0_9] : memref<1x32xf32, #tpu.memory_space<vmem>>, vector<1x32xf32>
    %23 = vector.broadcast %22 : vector<1x32xf32> to vector<16x32xf32>
    %24 = arith.addf %21, %23 : vector<16x32xf32>
    %c0_10 = arith.constant 0 : index
    %c0_11 = arith.constant 0 : index
    %25 = vector.load %arg4[%c0_10, %c0_11] : memref<16x32xf32, #tpu.memory_space<vmem>>, vector<16x32xf32>
    tpu.vector_store %arg4[%c0_10, %c0_11], %24 {strides = array<i32>} : memref<16x32xf32, #tpu.memory_space<vmem>>, vector<16x32xf32>,
    return
  }
  func.func @transform_0(%arg0: i32) -> (i32, i32) {
    %c0_i32 = arith.constant 0 : i32
    %c0_i32_0 = arith.constant 0 : i32
    return %arg0, %c0_i32 : i32, i32
  }
  func.func @transform_1(%arg0: i32) -> (i32, i32) {
    %c0_i32 = arith.constant 0 : i32
    %c0_i32_0 = arith.constant 0 : i32
    %c0_i32_1 = arith.constant 0 : i32
    return %c0_i32, %c0_i32_0 : i32, i32
  }
  func.func @transform_2(%arg0: i32) -> (i32, i32) {
    %c0_i32 = arith.constant 0 : i32
    %c0_i32_0 = arith.constant 0 : i32
    %c0_i32_1 = arith.constant 0 : i32
    return %c0_i32, %c0_i32_0 : i32, i32
  }
  func.func @transform_3(%arg0: i32) -> (i32, i32) {
    %c0_i32 = arith.constant 0 : i32
    %c0_i32_0 = arith.constant 0 : i32
    return %arg0, %c0_i32 : i32, i32
  }
}

</mosaic_0001>

<llo_original>
// kernel: tpu_custom_call.1
$region0: #{tpu_custom_call.1}
  #allocation0 [shape = 'u32[]', space=smem, size = 0x4, offset = 0x4, fixed_abs, tag = 'smem constant byte address 0x4 - core index']
  #allocation1 [shape = 'u32[144,128]{1,0:T(1,128)}', space=vmem, size = 0x12000, scoped, tag = 'internal scratch']
  %s0 = inlined_call_operand.hbm [shape: f32[16,32], index: 0, kind: input, shape index: {}]
  %s1 = inlined_call_operand.vmem [shape: f32[1,32], index: 1, kind: input, shape index: {}]
  %s2 = inlined_call_operand.vmem [shape: f32[1,32], index: 2, kind: input, shape index: {}]
  %s3 = inlined_call_operand.hbm [shape: f32[16,32], index: 3, kind: output, shape index: {}]
  %s4 = sld [smem:[#allocation0]]
  $region26: #{tpu_custom_call.1} parent=0
    _
  %s6 = ssub.s32 1, %s4
  %s7 = scalar_select 0, %s6, %s4
  $region1: #{tpu_custom_call.1} parent=0
    #allocation2 [shape = 'u8[8192]{0}', space=vmem, size = 0x2000, scoped, tag = 'input window, operand 0, single buffered']
    #allocation3 [shape = 's32[1]{0}', space=sflag, size = 0x4, scoped, tag = 'scoped memory for tpu_custom_call.1']
    #allocation4 [shape = 's32[1]{0}', space=sflag, size = 0x4, scoped, tag = 'scoped memory for tpu_custom_call.1']
    #allocation5 [shape = 'u8[8192]{0}', space=vmem, size = 0x2000, scoped, tag = 'output window, operand 0, single buffered']
    %8 = vsyncpa [#allocation3], 0
    %9 = vsyncpa [#allocation4], 0
    // Predicated region
    $region2: #{tpu_custom_call.1} parent=1 // pred_check
      _
    $region3: #{tpu_custom_call.1} parent=1 // pred_check_branch
      %11 = sbr.rel (0) target = $region5
    $region4: #{tpu_custom_call.1} parent=1 // pred_region
      %s13 = ssub.s32 256, 256
      %14 = vsyncadd [#allocation3], %s13
      %s15 = sshll.u32 [#allocation2], 4
      %s16 = int_to_ptr.vmem [resolvable:$true] %s15
      %21 = dma.hbm_to_vmem [thread:$0]  %s0, 256, %s16, [#allocation3], 128, 128, 8
    $region5: #{tpu_custom_call.1} parent=1 // pred_fallthru
      _
    // Predicated region
    $region6: #{tpu_custom_call.1} parent=1 // pred_check
      _
    $region7: #{tpu_custom_call.1} parent=1 // pred_check_branch
      %23 = sbr.rel (0) target = $region9
    $region8: #{tpu_custom_call.1} parent=1 // pred_region
      _
    $region9: #{tpu_custom_call.1} parent=1 // pred_fallthru
      _
    // Predicated region
    $region10: #{tpu_custom_call.1} parent=1 // pred_check
      _
    $region11: #{tpu_custom_call.1} parent=1 // pred_check_branch
      %25 = sbr.rel (0) target = $region13
    $region12: #{tpu_custom_call.1} parent=1 // pred_region
      _
    $region13: #{tpu_custom_call.1} parent=1 // pred_fallthru
      _
    // Predicated region
    $region14: #{tpu_custom_call.1} parent=1 // pred_check
      _
    $region15: #{tpu_custom_call.1} parent=1 // pred_check_branch
      %27 = sbr.rel (0) target = $region17
    $region16: #{tpu_custom_call.1} parent=1 // pred_region
      %28 = dma.done [#allocation3], 256
    $region17: #{tpu_custom_call.1} parent=1 // pred_fallthru
      _
    %v29 = vld [vmem:[#allocation2] sm:$0xff]
    %v30 = vld [vmem:[#allocation2 + $0x8] sm:$0xff]
    %vm31 = vcmask 261120
    %v32 = vsel %vm31, %v29, 0.0
    %33 = vadd.xlane.f32.xlu0 %v32
    %v34 = vpop.xlane.xlu0 %33
    %v35 = vsel %vm31, %v30, 0.0
    %36 = vadd.xlane.f32.xlu0 %v35
    %v37 = vpop.xlane.xlu0 %36
    %v38 = vmul.f32 %v34, 0.03125
    %v39 = vmul.f32 %v37, 0.03125
    %v40 = vsub.f32 %v29, %v38
    %v41 = vsub.f32 %v30, %v39
    %v42 = vmul.f32 %v40, %v40
    %v43 = vmul.f32 %v41, %v41
    %v44 = vsel %vm31, %v42, 0.0
    %45 = vadd.xlane.f32.xlu0 %v44
    %v46 = vpop.xlane.xlu0 %45
    %v47 = vsel %vm31, %v43, 0.0
    %48 = vadd.xlane.f32.xlu0 %v47
    %v49 = vpop.xlane.xlu0 %48
    %v50 = vmul.f32 %v46, 0.03125
    %v51 = vmul.f32 %v49, 0.03125
    %v52 = vrsqrt.pop %v50
    %v53 = vmul.f32 %v50, %v52
    %vm54 = vcmp.eq.f32.partialorder %v50, inf
    %v55 = vsel %vm54, %v50, %v53
    %vm56 = vcmp.eq.f32.partialorder %v50, 0.0
    %v57 = vand.u32 %v50, 2147483648
    %v58 = vsel %vm56, %v57, %v55
    %v59 = vrsqrt.pop %v51
    %v60 = vmul.f32 %v51, %v59
    %vm61 = vcmp.eq.f32.partialorder %v51, inf
    %v62 = vsel %vm61, %v51, %v60
    %vm63 = vcmp.eq.f32.partialorder %v51, 0.0
    %v64 = vand.u32 %v51, 2147483648
    %v65 = vsel %vm63, %v64, %v62
    %v66 = vadd.f32 %v58, 1e-05
    %v67 = vadd.f32 %v65, 1e-05
    %v68 = vrcp.pop %v66
    %v69 = vmul.f32 1.0, %v68
    %v70 = vrcp.pop %v67
    %v71 = vmul.f32 1.0, %v70
    %v72 = vld [vmem:[%s1] sm:$0x1]
    %v73 = vmul.f32 %v40, %v69
    %v74 = vmul.f32 %v41, %v71
    %v76 = vlaneseq
    %v77 = vshrl.u32 %v76, 7
    %v78 = vsub.s32 0, %v77
    %v79 = vrot.slane %v72, %v78
    %v81 = vmul.f32 %v79, %v73
    %v82 = vmul.f32 %v79, %v74
    %v83 = vld [vmem:[%s2] sm:$0x1]
    %v85 = vlaneseq
    %v86 = vshrl.u32 %v85, 7
    %v87 = vsub.s32 0, %v86
    %v88 = vrot.slane %v83, %v87
    %v90 = vadd.f32 %v81, %v88
    %v91 = vadd.f32 %v82, %v88
    %92 = vst.msk [vmem:[#allocation5] sm:$0xff] %vm31, %v90
    %93 = vst.msk [vmem:[#allocation5 + $0x8] sm:$0xff] %vm31, %v91
    // Predicated region
    $region18: #{tpu_custom_call.1} parent=1 // pred_check
      _
    $region19: #{tpu_custom_call.1} parent=1 // pred_check_branch
      %95 = sbr.rel (0) target = $region21
    $region20: #{tpu_custom_call.1} parent=1 // pred_region
      %s97 = ssub.s32 256, 256
      %98 = vsyncadd [#allocation4], %s97
      %s99 = sshll.u32 [#allocation5], 4
      %s100 = int_to_ptr.vmem [resolvable:$true] %s99
      %105 = dma.vmem_to_hbm [thread:$0]  %s100, 256, %s3, [#allocation4], 128, 128, 8
    $region21: #{tpu_custom_call.1} parent=1 // pred_fallthru
      _
    // Predicated region
    $region22: #{tpu_custom_call.1} parent=1 // pred_check
      _
    $region23: #{tpu_custom_call.1} parent=1 // pred_check_branch
      %107 = sbr.rel (0) target = $region25
    $region24: #{tpu_custom_call.1} parent=1 // pred_region
      %108 = dma.done [#allocation4], 256
    $region25: #{tpu_custom_call.1} parent=1 // pred_fallthru
      _
    %109 = vsyncpa [#allocation3], 1
    %110 = vsyncpa [#allocation4], 1

</llo_original>
